<compile_context>
chip_gen: v7x
topology: tpu7x:2x2x1
jax: 0.10.0
libtpu: 0.0.40
codegen_flags: <defaults>
</compile_context>

<pallas_src>
import functools

import jax
import jax.numpy as jnp
from jax.experimental import pallas as pl
from jax.experimental.pallas import tpu as pltpu


def _pos_rows_dma_kernel(tbl_hbm, out_hbm, sem, *, seq_len: int):
    # tbl_hbm: (num_positions, emb_dim) raw HBM ref of the embedding table.
    # out_hbm: (seq_len, emb_dim) raw HBM ref of the output.
    # Positions are arange(seq_len) -> output == first seq_len rows of the table.
    cp = pltpu.make_async_copy(tbl_hbm.at[pl.ds(0, seq_len), :], out_hbm, sem)
    cp.start()
    cp.wait()


def learned_positional_encoding(pos_table: jax.Array, inputs: jax.Array) -> jax.Array:
    """Equivalent of LearnedPositionalEncoding.forward(inputs).

    pos_table: (num_positions, embedding_dim) embedding weight (nn.Embedding.weight).
    inputs:    (bs, seq_len) -- only the shape is used (matches the PyTorch module).
    returns:   (bs, seq_len, embedding_dim)
    """
    bs, seq_len = inputs.shape
    num_positions, emb_dim = pos_table.shape

    # Exact PyTorch semantics: arange(seq_len).reshape(bs, seq_len) requires bs == 1.
    assert bs == 1, "reshape(bs, seq_len) of arange(seq_len) requires bs == 1 (matches PyTorch module)"
    # Guard against an unchecked OOB DMA read past the table.
    assert 1 <= seq_len <= num_positions, (
        f"seq_len ({seq_len}) must be in [1, num_positions={num_positions}]"
    )

    out2d = pl.pallas_call(
        functools.partial(_pos_rows_dma_kernel, seq_len=seq_len),
        out_shape=jax.ShapeDtypeStruct((seq_len, emb_dim), pos_table.dtype),
        in_specs=[pl.BlockSpec(memory_space=pl.ANY)],
        out_specs=pl.BlockSpec(memory_space=pl.ANY),
        scratch_shapes=[pltpu.SemaphoreType.DMA(())],
    )(pos_table)

    return out2d.reshape(bs, seq_len, emb_dim)


if __name__ == "__main__":
    # Module config (small, consistent with the forward); bs must be 1 for the
    # reshape in the reference forward to be valid.
    num_positions = 16
    embedding_dim = 32
    bs, seq_len = 1, 8

    key = jax.random.PRNGKey(0)
    k_table, k_inputs = jax.random.split(key)

    # Deterministic "nn.Embedding" weight (synthetic init, ~N(0,1) like PyTorch default).
    pos_table = jax.random.normal(k_table, (num_positions, embedding_dim), dtype=jnp.float32)

    # `inputs` content is irrelevant to the forward; only its shape matters.
    inputs = jax.random.randint(k_inputs, (bs, seq_len), 0, num_positions, dtype=jnp.int32)

    out = learned_positional_encoding(pos_table, inputs)
    out = jax.block_until_ready(out)

    # Reference check in plain JAX.
    ref = jnp.take(pos_table, jnp.arange(seq_len), axis=0).reshape(bs, seq_len, embedding_dim)
    assert out.shape == (bs, seq_len, embedding_dim)
    assert out.dtype == pos_table.dtype
    assert jnp.allclose(out, ref), "mismatch vs reference gather"

    print("KERNEL_OK")
</pallas_src>

<mosaic_0001>
module attributes {stable_mosaic.version = 11 : i64} {
  func.func @_pos_rows_dma_kernel(%arg0: memref<16x32xf32, #tpu.memory_space<any>>, %arg1: memref<8x32xf32, #tpu.memory_space<any>>, %arg2: memref<!tpu.dma_semaphore, #tpu.memory_space<semaphore_mem>>) attributes {dimension_semantics = [], scalar_prefetch = 0 : i64, scratch_operands = 1 : i64, tpu.core_type = #tpu.core_type<tc>} {
    %c0_i32 = arith.constant 0 : i32
    %c0_i32_0 = arith.constant 0 : i32
    %0 = tpu.memref_slice %arg0[%c0_i32, %c0_i32_0] : memref<16x32xf32, #tpu.memory_space<any>> -> memref<8x32xf32, #tpu.memory_space<any>>
    tpu.enqueue_dma source(%0 : memref<8x32xf32, #tpu.memory_space<any>>) target(%arg1 : memref<8x32xf32, #tpu.memory_space<any>>) target_semaphore(%arg2 : memref<!tpu.dma_semaphore, #tpu.memory_space<semaphore_mem>>)
    %c0_i32_1 = arith.constant 0 : i32
    %c0_i32_2 = arith.constant 0 : i32
    %1 = tpu.memref_slice %arg0[%c0_i32_1, %c0_i32_2] : memref<16x32xf32, #tpu.memory_space<any>> -> memref<8x32xf32, #tpu.memory_space<any>>
    tpu.wait_dma2 semaphore(%arg2 : memref<!tpu.dma_semaphore, #tpu.memory_space<semaphore_mem>>) src(%1 : memref<8x32xf32, #tpu.memory_space<any>>) dst(%arg1 : memref<8x32xf32, #tpu.memory_space<any>>)
    return
  }
}

</mosaic_0001>

<llo_original>
// kernel: tpu_custom_call.1
$region0: #{tpu_custom_call.1}
  #allocation0 [shape = 'u32[]', space=smem, size = 0x4, offset = 0x4, fixed_abs, tag = 'smem constant byte address 0x4 - core index']
  #allocation1 [shape = 'u32[144,128]{1,0:T(1,128)}', space=vmem, size = 0x12000, scoped, tag = 'internal scratch']
  #allocation2 [shape = 's32[1]{0}', space=sflag, size = 0x4, scoped, tag = 'scratch operand']
  #allocation3 [shape = 's32[]', space=sflag, size = 0x4, offset = 0, fixed_abs, tag = 'sflag constant byte address 0x0 - dummy sync flag']
  #allocation4 [shape = 'u32[0]{0}', space=smem, size = 0, offset = 0, fixed_abs, tag = 'smem constant byte address 0x0 - null']
  %s0 = inlined_call_operand.hbm [shape: f32[16,32], index: 0, kind: input, shape index: {}]
  %s1 = inlined_call_operand.hbm [shape: f32[8,32], index: 1, kind: output, shape index: {}]
  %s2 = sld [smem:[#allocation0]]
  $region2: #{tpu_custom_call.1} parent=0
    _
  %s4 = ssub.s32 1, %s2
  %s5 = scalar_select 0, %s4, %s2
  %s7 = sshll.u32 1, 14
  %s8 = sxor.u32 4294967295, %s7
  %s11 = sshll.u32 3, 24
  %s12 = sxor.u32 4294967295, %s11
  %s13 = sand.u32 0, %s12
  %s15 = sor.u32 %s13, 0
  %18 = dma.general %s0, 128, %s1, [#allocation2], [#allocation3], [#allocation4], %s15, 0
  %s19 = smul.u32 8, 1
  %s20 = sshll.u32 %s19, 4
  %21 = dma.done [#allocation2], %s20
  %22 = vsyncmov [#allocation2]
  %s23 = vpop.sfrf %22
  %p24 = scmp.eq.s32.totalorder %s23, 0
  %p25 = pneg %p24
  %27 = shalt.err (%p25)

</llo_original>
